<compile_context>
chip_gen: v7x
topology: tpu7x:2x2x1
jax: 0.10.0
libtpu: 0.0.40
codegen_flags: <defaults>
</compile_context>

<pallas_src>
import jax
import jax.numpy as jnp
from jax.experimental import pallas as pl
from jax.experimental.pallas import tpu as pltpu


def _area_kernel(emb_ref, aux_ref, m_emb_ref, w_aux_ref, bias_ref, out_ref):
    f32 = jnp.float32

    # Mean over the N*E entries of each area (char/L mean already done in the
    # wrapper).  (BA, NE, C) -> (BA, C), computed in f32 on the VPU/XLU.
    e_mean = jnp.mean(emb_ref[...].astype(f32), axis=1)

    # Precomposed embedding path: (BA, C) x (C, A_pad), bf16 MXU, f32 acc.
    out = jnp.dot(e_mean.astype(m_emb_ref.dtype), m_emb_ref[...],
                  preferred_element_type=f32)

    # Precomposed entry.data + per-point meta path:
    # aux = [entry_data (NE) | meta_flat (3N)]  ->  one (BA, S) x (S, A_pad) dot.
    out = out + jnp.dot(aux_ref[...], w_aux_ref[...], preferred_element_type=f32)

    # Fused bias (query_meaning, bq, be, bp, ba chains), lane-dense store.
    out_ref[...] = out + bias_ref[...]


def weather_time_area_interpreter(char_ids, entry_data, coord, timestamp,
                                  query_meaning, params, *, block_areas=None):
    """Batched forward over B independent areas.

    char_ids: (B, N, E, L) int32, entry_data: (B, N, E), coord: (B, N, 2),
    timestamp: (B, N, 1), query_meaning: (3+Q,).  Returns (B, A).
    """
    f32 = jnp.float32
    B, N, E, L = char_ids.shape
    C = params["emb"].shape[1]
    Q = params["Wq"].shape[0]
    A = params["Wa"].shape[0]
    NE = N * E
    S = NE + 3 * N
    A_pad = 128  # lane-dense output: pad the A columns, slice after the call

    # ---- activation prep (gather + L-mean in the wrapper, bf16 slab) --------
    emb_mean = (params["emb"][char_ids].astype(f32).mean(axis=3)   # (B, N, E, C)
                .reshape(B, NE, C).astype(jnp.bfloat16))           # (B, NE, C)
    data = entry_data.reshape(B, NE).astype(f32)                   # (B, NE)
    meta = jnp.concatenate([coord, timestamp], axis=-1).reshape(B, 3 * N).astype(f32)
    aux = jnp.concatenate([data, meta], axis=-1)                   # (B, S)

    # ---- weight precomposition (exact: the whole forward is affine) ---------
    entry_dim, query_dim = 1 + Q, 3 + Q
    Wq, We, Wp, Wa = (params[k].astype(f32) for k in ("Wq", "We", "Wp", "Wa"))
    bq, be, bp, ba = (params[k].astype(f32) for k in ("bq", "be", "bp", "ba"))

    WaT = Wa.T                                                      # (P, A)
    T1 = Wp[:, :entry_dim].T @ WaT                                  # (1+Q, A)
    T2 = We[:, 1:].T @ T1                                           # (Q, A)
    M_emb = Wq.T @ T2                                               # (C, A)
    v_data = We[:, 0] @ T1                                          # (A,)
    M_meta = Wp[:, entry_dim + query_dim:].T @ WaT                  # (3, A)
    bias = (query_meaning.astype(f32)
            @ (Wp[:, entry_dim:entry_dim + query_dim].T @ WaT)
            + bq @ T2 + be @ T1 + bp @ WaT + ba)                    # (A,)

    # One (S, A) slab implementing  mean_NE(data)*v_data + mean_N(meta)@M_meta.
    w_aux = jnp.concatenate([jnp.tile(v_data[None, :] / NE, (NE, 1)),
                             jnp.tile(M_meta / N, (N, 1))], axis=0)  # (S, A)

    pad = lambda x: jnp.pad(x, ((0, 0), (0, A_pad - A)))
    m_emb_p = pad(M_emb).astype(jnp.bfloat16)                       # (C, A_pad)
    w_aux_p = pad(w_aux)                                            # (S, A_pad)
    bias_p = pad(bias[None, :])                                     # (1, A_pad)

    # ---- grid over area blocks ----------------------------------------------
    if block_areas is None:
        block_areas = next((c for c in (128, 64, 32, 16, 8) if B % c == 0), B)
    BA = block_areas
    assert B % BA == 0, (B, BA)
    grid = (B // BA,)
    # VMEM per block (double-buffered activations + resident weights) is a few
    # hundred KiB even at BA=128, well under the 64 MiB v7x physical VMEM.

    out = pl.pallas_call(
        _area_kernel,
        out_shape=jax.ShapeDtypeStruct((B, A_pad), f32),
        grid=grid,
        in_specs=[
            # per-block activations
            pl.BlockSpec((BA, NE, C), lambda i: (i, 0, 0)),
            pl.BlockSpec((BA, S), lambda i: (i, 0)),
            # grid-resident precomposed weights (same block every step)
            pl.BlockSpec((C, A_pad), lambda i: (0, 0)),
            pl.BlockSpec((S, A_pad), lambda i: (0, 0)),
            pl.BlockSpec((1, A_pad), lambda i: (0, 0)),
        ],
        out_specs=pl.BlockSpec((BA, A_pad), lambda i: (i, 0)),
        compiler_params=pltpu.CompilerParams(
            dimension_semantics=("parallel",)),
    )(emb_mean, aux, m_emb_p, w_aux_p, bias_p)

    # TODO(synk): for very large B, pass char_ids via PrefetchScalarGridSpec and
    # gather the tiny (V, C) table in-kernel to avoid the emb_mean HBM round-trip.
    return out[:, :A]


def _reference(char_ids, entry_data, coord, timestamp, query_meaning, params):
    """Literal pure-JAX translation of the PyTorch forward, vmapped over areas."""
    def one_area(ci, ed, co, ts):
        emb = params["emb"][ci]                                  # (N, E, L, C)
        emb_mean = emb.mean(axis=2)                              # (N, E, C)
        qmean = emb_mean @ params["Wq"].T + params["bq"]         # (N, E, Q)
        entry_in = jnp.concatenate([ed[..., None], qmean], axis=-1)
        entry_meaning = entry_in @ params["We"].T + params["be"]  # (N, E, 1+Q)
        meta = jnp.concatenate([co, ts], axis=-1)                # (N, 3)
        n, e = ed.shape
        q_exp = jnp.broadcast_to(query_meaning, (n, e, query_meaning.shape[0]))
        m_exp = jnp.broadcast_to(meta[:, None, :], (n, e, 3))
        cat = jnp.concatenate([entry_meaning, q_exp, m_exp], axis=-1)
        point_in = cat.mean(axis=1)                              # (N, D)
        point_meaning = point_in @ params["Wp"].T + params["bp"]  # (N, P)
        area = point_meaning @ params["Wa"].T + params["ba"]      # (N, A)
        return area.mean(axis=0)

    with jax.default_matmul_precision("highest"):
        return jax.vmap(one_area)(char_ids, entry_data, coord, timestamp)


if __name__ == "__main__":
    # Small synthetic configuration.
    V = 64          # CHAR_MAX_VALUE + 1 (synthetic)
    C = 16          # char_embedding_dim
    Q = 16          # quantity_meaning_dim
    P = 32          # weather_time_point_meaning_dim
    A = 24          # weather_time_area_meaning_dim
    N = 4           # weather time points per area
    E = 3           # weather entries per time point
    L = 8           # chars per quantity encoding
    B = 32          # number of areas (batched per the perf review)
    D = (1 + Q) + (3 + Q) + 3

    key = jax.random.PRNGKey(0)
    ks = jax.random.split(key, 16)

    params = {
        "emb": 0.1 * jax.random.normal(ks[0], (V, C), jnp.float32),
        "Wq": 0.1 * jax.random.normal(ks[1], (Q, C), jnp.float32),
        "bq": 0.1 * jax.random.normal(ks[2], (Q,), jnp.float32),
        "We": 0.1 * jax.random.normal(ks[3], (1 + Q, 1 + Q), jnp.float32),
        "be": 0.1 * jax.random.normal(ks[4], (1 + Q,), jnp.float32),
        "Wp": 0.1 * jax.random.normal(ks[5], (P, D), jnp.float32),
        "bp": 0.1 * jax.random.normal(ks[6], (P,), jnp.float32),
        "Wa": 0.1 * jax.random.normal(ks[7], (A, P), jnp.float32),
        "ba": 0.1 * jax.random.normal(ks[8], (A,), jnp.float32),
    }

    char_ids = jax.random.randint(ks[9], (B, N, E, L), 0, V, jnp.int32)
    entry_data = jax.random.normal(ks[10], (B, N, E), jnp.float32)
    coord = jax.random.normal(ks[11], (B, N, 2), jnp.float32)
    timestamp = jax.random.normal(ks[12], (B, N, 1), jnp.float32)
    query_meaning = jax.random.normal(ks[13], (3 + Q,), jnp.float32)

    out = weather_time_area_interpreter(char_ids, entry_data, coord, timestamp,
                                        query_meaning, params, block_areas=8)
    out = jax.block_until_ready(out)
    assert out.shape == (B, A), out.shape

    ref = _reference(char_ids, entry_data, coord, timestamp, query_meaning, params)
    ref = jax.block_until_ready(ref)
    assert jnp.allclose(out, ref, rtol=1e-2, atol=1e-2), (out, ref)

    print("KERNEL_OK")
</pallas_src>

<mosaic_0001>
module attributes {stable_mosaic.version = 11 : i64} {
  func.func @_area_kernel(%arg0: i32, %arg1: memref<8x12x16xbf16, #tpu.memory_space<vmem>>, %arg2: memref<8x24xf32, #tpu.memory_space<vmem>>, %arg3: memref<16x128xbf16, #tpu.memory_space<vmem>>, %arg4: memref<24x128xf32, #tpu.memory_space<vmem>>, %arg5: memref<1x128xf32, #tpu.memory_space<vmem>>, %arg6: memref<8x128xf32, #tpu.memory_space<vmem>>) attributes {dimension_semantics = [#tpu.dimension_semantics<parallel>], iteration_bounds = array<i64: 4>, scalar_prefetch = 0 : i64, scratch_operands = 0 : i64, tpu.core_type = #tpu.core_type<tc>, window_params = [{transform_indices = @transform_0, window_bounds = array<i64: 8, 12, 16>}, {transform_indices = @transform_1, window_bounds = array<i64: 8, 24>}, {pipeline_mode = #tpu.pipeline_mode<synchronous>, transform_indices = @transform_2, window_bounds = array<i64: 16, 128>}, {pipeline_mode = #tpu.pipeline_mode<synchronous>, transform_indices = @transform_3, window_bounds = array<i64: 24, 128>}, {pipeline_mode = #tpu.pipeline_mode<synchronous>, transform_indices = @transform_4, window_bounds = array<i64: 1, 128>}, {transform_indices = @transform_5, window_bounds = array<i64: 8, 128>}]} {
    %c0 = arith.constant 0 : index
    %c0_0 = arith.constant 0 : index
    %c0_1 = arith.constant 0 : index
    %0 = vector.load %arg1[%c0, %c0_0, %c0_1] : memref<8x12x16xbf16, #tpu.memory_space<vmem>>, vector<8x12x16xbf16>
    %1 = arith.extf %0 : vector<8x12x16xbf16> to vector<8x12x16xf32>
    %cst = arith.constant dense<0.000000e+00> : vector<8x16xf32>
    %2 = vector.multi_reduction <add>, %1, %cst [1] : vector<8x12x16xf32> to vector<8x16xf32>
    %cst_2 = arith.constant 1.200000e+01 : f32
    %3 = vector.broadcast %cst_2 : f32 to vector<8x16xf32>
    %4 = arith.divf %2, %3 : vector<8x16xf32>
    %5 = arith.truncf %4 : vector<8x16xf32> to vector<8x16xbf16>
    %c0_3 = arith.constant 0 : index
    %c0_4 = arith.constant 0 : index
    %6 = vector.load %arg3[%c0_3, %c0_4] : memref<16x128xbf16, #tpu.memory_space<vmem>>, vector<16x128xbf16>
    %cst_5 = arith.constant dense<0.000000e+00> : vector<8x128xf32>
    %7 = tpu.matmul %5, %6, %cst_5 {dimension_numbers = #tpu.dot_dimension_numbers<[1], [0], [0], [1], [0, 0, 1, 1], [], []>} : vector<8x16xbf16>, vector<16x128xbf16>, vector<8x128xf32> -> vector<8x128xf32>
    %c0_6 = arith.constant 0 : index
    %c0_7 = arith.constant 0 : index
    %8 = vector.load %arg2[%c0_6, %c0_7] : memref<8x24xf32, #tpu.memory_space<vmem>>, vector<8x24xf32>
    %c0_8 = arith.constant 0 : index
    %c0_9 = arith.constant 0 : index
    %9 = vector.load %arg4[%c0_8, %c0_9] : memref<24x128xf32, #tpu.memory_space<vmem>>, vector<24x128xf32>
    %cst_10 = arith.constant dense<0.000000e+00> : vector<8x128xf32>
    %10 = tpu.matmul %8, %9, %cst_10 {dimension_numbers = #tpu.dot_dimension_numbers<[1], [0], [0], [1], [0, 0, 1, 1], [], []>} : vector<8x24xf32>, vector<24x128xf32>, vector<8x128xf32> -> vector<8x128xf32>
    %11 = arith.addf %7, %10 : vector<8x128xf32>
    %c0_11 = arith.constant 0 : index
    %c0_12 = arith.constant 0 : index
    %12 = vector.load %arg5[%c0_11, %c0_12] : memref<1x128xf32, #tpu.memory_space<vmem>>, vector<1x128xf32>
    %13 = vector.broadcast %12 : vector<1x128xf32> to vector<8x128xf32>
    %14 = arith.addf %11, %13 : vector<8x128xf32>
    %c0_13 = arith.constant 0 : index
    %c0_14 = arith.constant 0 : index
    %15 = vector.load %arg6[%c0_13, %c0_14] : memref<8x128xf32, #tpu.memory_space<vmem>>, vector<8x128xf32>
    tpu.vector_store %arg6[%c0_13, %c0_14], %14 {strides = array<i32>} : memref<8x128xf32, #tpu.memory_space<vmem>>, vector<8x128xf32>,
    return
  }
  func.func @transform_0(%arg0: i32) -> (i32, i32, i32) {
    %c0_i32 = arith.constant 0 : i32
    %c0_i32_0 = arith.constant 0 : i32
    %c0_i32_1 = arith.constant 0 : i32
    return %arg0, %c0_i32, %c0_i32_0 : i32, i32, i32
  }
  func.func @transform_1(%arg0: i32) -> (i32, i32) {
    %c0_i32 = arith.constant 0 : i32
    %c0_i32_0 = arith.constant 0 : i32
    return %arg0, %c0_i32 : i32, i32
  }
  func.func @transform_2(%arg0: i32) -> (i32, i32) {
    %c0_i32 = arith.constant 0 : i32
    %c0_i32_0 = arith.constant 0 : i32
    %c0_i32_1 = arith.constant 0 : i32
    return %c0_i32, %c0_i32_0 : i32, i32
  }
  func.func @transform_3(%arg0: i32) -> (i32, i32) {
    %c0_i32 = arith.constant 0 : i32
    %c0_i32_0 = arith.constant 0 : i32
    %c0_i32_1 = arith.constant 0 : i32
    return %c0_i32, %c0_i32_0 : i32, i32
  }
  func.func @transform_4(%arg0: i32) -> (i32, i32) {
    %c0_i32 = arith.constant 0 : i32
    %c0_i32_0 = arith.constant 0 : i32
    %c0_i32_1 = arith.constant 0 : i32
    return %c0_i32, %c0_i32_0 : i32, i32
  }
  func.func @transform_5(%arg0: i32) -> (i32, i32) {
    %c0_i32 = arith.constant 0 : i32
    %c0_i32_0 = arith.constant 0 : i32
    return %arg0, %c0_i32 : i32, i32
  }
}

</mosaic_0001>

<llo_original>
// kernel: tpu_custom_call.1
$region0: #{tpu_custom_call.1}
  #allocation0 [shape = 'u32[]', space=smem, size = 0x4, offset = 0x4, fixed_abs, tag = 'smem constant byte address 0x4 - core index']
  #allocation1 [shape = 'u32[144,128]{1,0:T(1,128)}', space=vmem, size = 0x12000, scoped, tag = 'internal scratch']
  %s0 = inlined_call_operand.vmem [shape: bf16[32,12,16], index: 0, kind: input, shape index: {}]
  %s1 = inlined_call_operand.vmem [shape: f32[32,24], index: 1, kind: input, shape index: {}]
  %s2 = inlined_call_operand.vmem [shape: bf16[16,128], index: 2, kind: input, shape index: {}]
  %s3 = inlined_call_operand.vmem [shape: f32[24,128], index: 3, kind: input, shape index: {}]
  %s4 = inlined_call_operand.vmem [shape: f32[1,128], index: 4, kind: input, shape index: {}]
  %s5 = inlined_call_operand.hbm [shape: f32[32,128], index: 5, kind: output, shape index: {}]
  %s6 = sld [smem:[#allocation0]]
  $region53: #{tpu_custom_call.1} parent=0
    _
  %s8 = ssub.s32 1, %s6
  %s9 = scalar_select 0, %s8, %s6
  $region1: #{tpu_custom_call.1} parent=0
    #allocation2 [shape = 'u8[8192]{0}', space=vmem, size = 0x2000, scoped, tag = 'output window, operand 0']
    #allocation3 [shape = 's32[2]{0}', space=sflag, size = 0x8, scoped, tag = 'scoped memory for tpu_custom_call.1']
    %10 = vsyncpa [#allocation3], 0
    %s11 = scalar_lea.sflag [#allocation3], 1
    %12 = vsyncpa %s11, 0
    loop: start=0, step=1, limit=6
    $region2: #{tpu_custom_call.1} parent=1 // loop_pre_header
      _
    $region3: #{tpu_custom_call.1} parent=1 // loop_header
      %s14 = sphi 0, %s18
      %p15 = scmp.ge.s32.totalorder %s14, 6
      %s24 = sphi 0, %s26
      %s27 = sphi 0, %s24
      %s28 = sphi 0, %s27
      %s44 = sphi 0, %s28
      %s50 = sphi 0, %s52
      %s53 = sphi 0, %s50
      %s54 = sphi 0, %s53
      %s70 = sphi 0, %s54
      %s74 = sphi 0, %s74
      %s76 = sphi 0, %s74
      %s77 = sphi 0, %s76
      %s91 = sphi 0, %s77
      %s95 = sphi 0, %s95
      %s97 = sphi 0, %s95
      %s98 = sphi 0, %s97
      %s112 = sphi 0, %s98
      %s116 = sphi 0, %s116
      %s118 = sphi 0, %s116
      %s119 = sphi 0, %s118
      %s133 = sphi 0, %s119
      %s139 = sphi 0, %s141
      %s142 = sphi 0, %s139
      %s143 = sphi 0, %s142
      %s159 = sphi 0, %s143
    $region4: #{tpu_custom_call.1} parent=1 // loop_header_branch
      %17 = sbr.rel (%p15) target = $region8
    $region5: #{tpu_custom_call.1} parent=1 // loop_body
      %s19 = ssub.s32 %s14, 1
      %s20 = ssub.s32 %s14, 2
      %s21 = sadd.s32 %s14, 1
      %s22 = ssub.s32 %s14, %s21
      %p23 = scmp.eq.s32.totalorder %s22, 0
      %s25 = sadd.s32 %s24, 1
      %s26 = scalar_select %p23, %s24, %s25
      %p29 = pneg %p23
      %p30 = scmp.eq.s32.totalorder %s14, 3
      %p31 = por %p29, %p30
      %p32 = scmp.ne.s32.totalorder %s24, %s27
      %p33 = scmp.eq.s32.totalorder %s14, 0
      %p34 = por %p32, %p33
      %p35 = scmp.ne.s32.totalorder %s24, %s27
      %p36 = scmp.eq.s32.totalorder %s19, 3
      %p37 = por %p35, %p36
      %p38 = scmp.ne.s32.totalorder %s27, %s28
      %p39 = scmp.eq.s32.totalorder %s19, 0
      %p40 = por %p38, %p39
      %p41 = scmp.ne.s32.totalorder %s27, %s28
      %p42 = scmp.eq.s32.totalorder %s20, 3
      %p43 = por %p41, %p42
      %p45 = scmp.ne.s32.totalorder %s28, %s44
      %p46 = scmp.eq.s32.totalorder %s20, 0
      %p47 = por %p45, %p46
      %s48 = ssub.s32 %s14, %s21
      %p49 = scmp.eq.s32.totalorder %s48, 0
      %s51 = sadd.s32 %s50, 1
      %s52 = scalar_select %p49, %s50, %s51
      %p55 = pneg %p49
      %p56 = scmp.eq.s32.totalorder %s14, 3
      %p57 = por %p55, %p56
      %p58 = scmp.ne.s32.totalorder %s50, %s53
      %p59 = scmp.eq.s32.totalorder %s14, 0
      %p60 = por %p58, %p59
      %p61 = scmp.ne.s32.totalorder %s50, %s53
      %p62 = scmp.eq.s32.totalorder %s19, 3
      %p63 = por %p61, %p62
      %p64 = scmp.ne.s32.totalorder %s53, %s54
      %p65 = scmp.eq.s32.totalorder %s19, 0
      %p66 = por %p64, %p65
      %p67 = scmp.ne.s32.totalorder %s53, %s54
      %p68 = scmp.eq.s32.totalorder %s20, 3
      %p69 = por %p67, %p68
      %p71 = scmp.ne.s32.totalorder %s54, %s70
      %p72 = scmp.eq.s32.totalorder %s20, 0
      %p73 = por %p71, %p72
      %s75 = sadd.s32 %s74, 1
      %p78 = scmp.eq.s32.totalorder %s14, 3
      %p79 = scmp.ne.s32.totalorder %s74, %s76
      %p80 = scmp.eq.s32.totalorder %s14, 0
      %p81 = por %p79, %p80
      %p82 = scmp.ne.s32.totalorder %s74, %s76
      %p83 = scmp.eq.s32.totalorder %s19, 3
      %p84 = por %p82, %p83
      %p85 = scmp.ne.s32.totalorder %s76, %s77
      %p86 = scmp.eq.s32.totalorder %s19, 0
      %p87 = por %p85, %p86
      %p88 = scmp.ne.s32.totalorder %s76, %s77
      %p89 = scmp.eq.s32.totalorder %s20, 3
      %p90 = por %p88, %p89
      %p92 = scmp.ne.s32.totalorder %s77, %s91
      %p93 = scmp.eq.s32.totalorder %s20, 0
      %p94 = por %p92, %p93
      %s96 = sadd.s32 %s95, 1
      %p99 = scmp.eq.s32.totalorder %s14, 3
      %p100 = scmp.ne.s32.totalorder %s95, %s97
      %p101 = scmp.eq.s32.totalorder %s14, 0
      %p102 = por %p100, %p101
      %p103 = scmp.ne.s32.totalorder %s95, %s97
      %p104 = scmp.eq.s32.totalorder %s19, 3
      %p105 = por %p103, %p104
      %p106 = scmp.ne.s32.totalorder %s97, %s98
      %p107 = scmp.eq.s32.totalorder %s19, 0
      %p108 = por %p106, %p107
      %p109 = scmp.ne.s32.totalorder %s97, %s98
      %p110 = scmp.eq.s32.totalorder %s20, 3
      %p111 = por %p109, %p110
      %p113 = scmp.ne.s32.totalorder %s98, %s112
      %p114 = scmp.eq.s32.totalorder %s20, 0
      %p115 = por %p113, %p114
      %s117 = sadd.s32 %s116, 1
      %p120 = scmp.eq.s32.totalorder %s14, 3
      %p121 = scmp.ne.s32.totalorder %s116, %s118
      %p122 = scmp.eq.s32.totalorder %s14, 0
      %p123 = por %p121, %p122
      %p124 = scmp.ne.s32.totalorder %s116, %s118
      %p125 = scmp.eq.s32.totalorder %s19, 3
      %p126 = por %p124, %p125
      %p127 = scmp.ne.s32.totalorder %s118, %s119
      %p128 = scmp.eq.s32.totalorder %s19, 0
      %p129 = por %p127, %p128
      %p130 = scmp.ne.s32.totalorder %s118, %s119
      %p131 = scmp.eq.s32.totalorder %s20, 3
      %p132 = por %p130, %p131
      %p134 = scmp.ne.s32.totalorder %s119, %s133
      %p135 = scmp.eq.s32.totalorder %s20, 0
      %p136 = por %p134, %p135
      %s137 = ssub.s32 %s14, %s21
      %p138 = scmp.eq.s32.totalorder %s137, 0
      %s140 = sadd.s32 %s139, 1
      %s141 = scalar_select %p138, %s139, %s140
      %p144 = pneg %p138
      %p145 = scmp.eq.s32.totalorder %s14, 3
      %p146 = por %p144, %p145
      %p147 = scmp.ne.s32.totalorder %s139, %s142
      %p148 = scmp.eq.s32.totalorder %s14, 0
      %p149 = por %p147, %p148
      %p150 = scmp.ne.s32.totalorder %s139, %s142
      %p151 = scmp.eq.s32.totalorder %s19, 3
      %p152 = por %p150, %p151
      %p153 = scmp.ne.s32.totalorder %s142, %s143
      %p154 = scmp.eq.s32.totalorder %s19, 0
      %p155 = por %p153, %p154
      %p156 = scmp.ne.s32.totalorder %s142, %s143
      %p157 = scmp.eq.s32.totalorder %s20, 3
      %p158 = por %p156, %p157
      %p160 = scmp.ne.s32.totalorder %s143, %s159
      %p161 = scmp.eq.s32.totalorder %s20, 0
      %p162 = por %p160, %p161
      %p163 = scmp.le.s32.totalorder 1, %s14
      %p164 = scmp.lt.s32.totalorder %s14, 5
      %p165 = pnand %p163, %p164
      %p166 = pneg %p165
      // Predicated region
      $region9: #{tpu_custom_call.1} parent=5 // pred_check
        _
      $region10: #{tpu_custom_call.1} parent=5 // pred_check_branch
        %168 = sbr.rel (%p165) target = $region12
      $region11: #{tpu_custom_call.1} parent=5 // pred_region
        %s169 = ssub.s32 %s14, 1
        // Predicated region
        $region13: #{tpu_custom_call.1} parent=11 // pred_check
          %p170 = pneg %p87
        $region14: #{tpu_custom_call.1} parent=11 // pred_check_branch
          %172 = sbr.rel (%p170) target = $region16
        $region15: #{tpu_custom_call.1} parent=11 // pred_region
          _
        $region16: #{tpu_custom_call.1} parent=11 // pred_fallthru
          _
        // Predicated region
        $region17: #{tpu_custom_call.1} parent=11 // pred_check
          %p173 = pneg %p108
        $region18: #{tpu_custom_call.1} parent=11 // pred_check_branch
          %175 = sbr.rel (%p173) target = $region20
        $region19: #{tpu_custom_call.1} parent=11 // pred_region
          _
        $region20: #{tpu_custom_call.1} parent=11 // pred_fallthru
          _
        // Predicated region
        $region21: #{tpu_custom_call.1} parent=11 // pred_check
          %p176 = pneg %p129
        $region22: #{tpu_custom_call.1} parent=11 // pred_check_branch
          %178 = sbr.rel (%p176) target = $region24
        $region23: #{tpu_custom_call.1} parent=11 // pred_region
          _
        $region24: #{tpu_custom_call.1} parent=11 // pred_fallthru
          _
      $region12: #{tpu_custom_call.1} parent=5 // pred_fallthru
        _
      %p179 = scmp.lt.s32.totalorder %s14, 4
      // Predicated region
      $region25: #{tpu_custom_call.1} parent=5 // pred_check
        %p180 = pneg %p179
      $region26: #{tpu_custom_call.1} parent=5 // pred_check_branch
        %182 = sbr.rel (%p180) target = $region28
      $region27: #{tpu_custom_call.1} parent=5 // pred_region
        // Predicated region
        $region29: #{tpu_custom_call.1} parent=27 // pred_check
          %p183 = pneg %p34
        $region30: #{tpu_custom_call.1} parent=27 // pred_check_branch
          %185 = sbr.rel (%p183) target = $region32
        $region31: #{tpu_custom_call.1} parent=27 // pred_region
          %s186 = smul.u32 8, %s14
          %p187 = scmp.lt.s32.totalorder %s186, 31
          %s188 = scalar_select %p187, %s186, 31
          %s189 = smul.addr %s188, 2
          %s190 = smul.addr %s189, 4
          %s191 = scalar_lea.vmem %s0, %s190
          %s192 = smul.u32 8, %s14
        $region32: #{tpu_custom_call.1} parent=27 // pred_fallthru
          _
        // Predicated region
        $region33: #{tpu_custom_call.1} parent=27 // pred_check
          %p193 = pneg %p60
        $region34: #{tpu_custom_call.1} parent=27 // pred_check_branch
          %195 = sbr.rel (%p193) target = $region36
        $region35: #{tpu_custom_call.1} parent=27 // pred_region
          %p196 = scmp.lt.s32.totalorder %s14, 3
          %s197 = scalar_select %p196, %s14, 3
          %s198 = smul.addr %s197, 8
          %s199 = scalar_lea.vmem %s1, %s198
        $region36: #{tpu_custom_call.1} parent=27 // pred_fallthru
          _
      $region28: #{tpu_custom_call.1} parent=5 // pred_fallthru
        _
      %p200 = scmp.le.s32.totalorder 1, %s14
      %p201 = scmp.lt.s32.totalorder %s14, 5
      %p202 = pnand %p200, %p201
      %p203 = pneg %p202
      // Predicated region
      $region37: #{tpu_custom_call.1} parent=5 // pred_check
        _
      $region38: #{tpu_custom_call.1} parent=5 // pred_check_branch
        %205 = sbr.rel (%p202) target = $region40
      $region39: #{tpu_custom_call.1} parent=5 // pred_region
        %s206 = ssub.s32 %s14, 1
        %s207 = smul.u32 8, %s19
        %p208 = scmp.lt.s32.totalorder %s207, 31
        %s209 = scalar_select %p208, %s207, 31
        %s210 = smul.addr %s209, 2
        %s211 = smul.addr %s210, 4
        %s212 = scalar_lea.vmem %s0, %s211
        %p213 = pneg %p40
        %p214 = pneg %p37
        %p215 = scmp.lt.s32.totalorder %s19, 3
        %s216 = scalar_select %p215, %s19, 3
        %s217 = smul.addr %s216, 8
        %s218 = scalar_lea.vmem %s1, %s217
        %p219 = pneg %p66
        %p220 = pneg %p63
        %p221 = pneg %p87
        %p222 = pneg %p84
        %p223 = pneg %p108
        %p224 = pneg %p105
        %p225 = pneg %p129
        %p226 = pneg %p126
        %p227 = pneg %p155
        %p228 = pneg %p152
        %s229 = sand.u32 %s142, 1
        %s230 = scalar_lea.sflag [#allocation3], %s229
        %s231 = sand.u32 %s142, 1
        %s232 = smul.addr %s231, 8
        %s233 = scalar_lea.vmem [#allocation2], %s232
        %s234 = smul.u32 8, %s19
        %p235 = scmp.lt.s32.totalorder %s234, 31
        %s236 = scalar_select %p235, %s234, 31
        %s237 = smul.addr %s236, 2
        %s238 = smul.addr %s237, 4
        %s239 = scalar_lea.vmem %s0, %s238
        %s240 = smul.u32 8, %s19
        %p241 = scmp.lt.s32.totalorder %s19, 3
        %s242 = scalar_select %p241, %s19, 3
        %s243 = smul.addr %s242, 8
        %s244 = scalar_lea.vmem %s1, %s243
        %v246 = vld [vmem:[%s239] sm:$0xf]
        %v247 = vld [vmem:[%s239 + $0x4] sm:$0x3]
        %v248 = vld [vmem:[%s239 + $0x8] sm:$0xf]
        %v249 = vld [vmem:[%s239 + $0xc] sm:$0x3]
        %v250 = vld [vmem:[%s239 + $0x10] sm:$0xf]
        %v251 = vld [vmem:[%s239 + $0x14] sm:$0x3]
        %v252 = vld [vmem:[%s239 + $0x18] sm:$0xf]
        %v253 = vld [vmem:[%s239 + $0x1c] sm:$0x3]
        %v254 = vld [vmem:[%s239 + $0x20] sm:$0xf]
        %v255 = vld [vmem:[%s239 + $0x24] sm:$0x3]
        %v256 = vld [vmem:[%s239 + $0x28] sm:$0xf]
        %v257 = vld [vmem:[%s239 + $0x2c] sm:$0x3]
        %v258 = vld [vmem:[%s239 + $0x30] sm:$0xf]
        %v259 = vld [vmem:[%s239 + $0x34] sm:$0x3]
        %v260 = vld [vmem:[%s239 + $0x38] sm:$0xf]
        %v261 = vld [vmem:[%s239 + $0x3c] sm:$0x3]
        %v262 = vunpack.c.l.bf16 %v246
        %v263 = vunpack.c.l.bf16 %v247
        %v264 = vunpack.c.l.bf16 %v248
        %v265 = vunpack.c.l.bf16 %v249
        %v266 = vunpack.c.l.bf16 %v250
        %v267 = vunpack.c.l.bf16 %v251
        %v268 = vunpack.c.l.bf16 %v252
        %v269 = vunpack.c.l.bf16 %v253
        %v270 = vunpack.c.l.bf16 %v254
        %v271 = vunpack.c.l.bf16 %v255
        %v272 = vunpack.c.l.bf16 %v256
        %v273 = vunpack.c.l.bf16 %v257
        %v274 = vunpack.c.l.bf16 %v258
        %v275 = vunpack.c.l.bf16 %v259
        %v276 = vunpack.c.l.bf16 %v260
        %v277 = vunpack.c.l.bf16 %v261
        %vm278 = vcmask 130048
        %v279 = vsel %vm278, %v262, 0.0
        %vm280 = vcmask 125952
        %v281 = vsel %vm280, %v263, 0.0
        %v282 = vadd.f32 %v279, %v281
        %v283 = vrot.slane %v282, 4
        %v284 = vadd.f32 %v282, %v283
        %v285 = vrot.slane %v284, 2
        %v286 = vadd.f32 %v284, %v285
        %v287 = vrot.slane %v286, 1
        %v288 = vadd.f32 %v286, %v287
        %v289 = vsel %vm278, %v264, 0.0
        %v290 = vsel %vm280, %v265, 0.0
        %v291 = vadd.f32 %v289, %v290
        %v292 = vrot.slane %v291, 4
        %v293 = vadd.f32 %v291, %v292
        %v294 = vrot.slane %v293, 2
        %v295 = vadd.f32 %v293, %v294
        %v296 = vrot.slane %v295, 1
        %v297 = vadd.f32 %v295, %v296
        %v298 = vsel %vm278, %v266, 0.0
        %v299 = vsel %vm280, %v267, 0.0
        %v300 = vadd.f32 %v298, %v299
        %v301 = vrot.slane %v300, 4
        %v302 = vadd.f32 %v300, %v301
        %v303 = vrot.slane %v302, 2
        %v304 = vadd.f32 %v302, %v303
        %v305 = vrot.slane %v304, 1
        %v306 = vadd.f32 %v304, %v305
        %v307 = vsel %vm278, %v268, 0.0
        %v308 = vsel %vm280, %v269, 0.0
        %v309 = vadd.f32 %v307, %v308
        %v310 = vrot.slane %v309, 4
        %v311 = vadd.f32 %v309, %v310
        %v312 = vrot.slane %v311, 2
        %v313 = vadd.f32 %v311, %v312
        %v314 = vrot.slane %v313, 1
        %v315 = vadd.f32 %v313, %v314
        %v316 = vsel %vm278, %v270, 0.0
        %v317 = vsel %vm280, %v271, 0.0
        %v318 = vadd.f32 %v316, %v317
        %v319 = vrot.slane %v318, 4
        %v320 = vadd.f32 %v318, %v319
        %v321 = vrot.slane %v320, 2
        %v322 = vadd.f32 %v320, %v321
        %v323 = vrot.slane %v322, 1
        %v324 = vadd.f32 %v322, %v323
        %v325 = vsel %vm278, %v272, 0.0
        %v326 = vsel %vm280, %v273, 0.0
        %v327 = vadd.f32 %v325, %v326
        %v328 = vrot.slane %v327, 4
        %v329 = vadd.f32 %v327, %v328
        %v330 = vrot.slane %v329, 2
        %v331 = vadd.f32 %v329, %v330
        %v332 = vrot.slane %v331, 1
        %v333 = vadd.f32 %v331, %v332
        %v334 = vsel %vm278, %v274, 0.0
        %v335 = vsel %vm280, %v275, 0.0
        %v336 = vadd.f32 %v334, %v335
        %v337 = vrot.slane %v336, 4
        %v338 = vadd.f32 %v336, %v337
        %v339 = vrot.slane %v338, 2
        %v340 = vadd.f32 %v338, %v339
        %v341 = vrot.slane %v340, 1
        %v342 = vadd.f32 %v340, %v341
        %v343 = vsel %vm278, %v276, 0.0
        %v344 = vsel %vm280, %v277, 0.0
        %v345 = vadd.f32 %v343, %v344
        %v346 = vrot.slane %v345, 4
        %v347 = vadd.f32 %v345, %v346
        %v348 = vrot.slane %v347, 2
        %v349 = vadd.f32 %v347, %v348
        %v350 = vrot.slane %v349, 1
        %v351 = vadd.f32 %v349, %v350
        %v352 = vrcp.pop 12.0
        %v353 = vmul.f32 %v288, %v352
        %v354 = vmul.f32 %v297, %v352
        %v355 = vmul.f32 %v306, %v352
        %v356 = vmul.f32 %v315, %v352
        %v357 = vmul.f32 %v324, %v352
        %v358 = vmul.f32 %v333, %v352
        %v359 = vmul.f32 %v342, %v352
        %v360 = vmul.f32 %v351, %v352
        %v361 = vpack.c.bf16 %v353, %v353
        %v362 = vpack.c.bf16 %v354, %v354
        %v363 = vpack.c.bf16 %v355, %v355
        %v364 = vpack.c.bf16 %v356, %v356
        %v365 = vpack.c.bf16 %v357, %v357
        %v366 = vpack.c.bf16 %v358, %v358
        %v367 = vpack.c.bf16 %v359, %v359
        %v368 = vpack.c.bf16 %v360, %v360
        %v369 = vld [vmem:[%s2] sm:$0xf]
        %v370 = vld [vmem:[%s2 + $0x4] sm:$0xf]
        %v371 = vld [vmem:[%s244] sm:$0xff]
        %v372 = vld [vmem:[%s3] sm:$0xff]
        %v373 = vld [vmem:[%s3 + $0x8] sm:$0xff]
        %v374 = vld [vmem:[%s3 + $0x10] sm:$0xff]
        %vm375 = vcmask 195584
        %v377 = vsel %vm375, %v371, 0
        %379 = vmatprep.subr.mxu0 0.0
        %380 = vmatpush1.msra.mxu0 %v372
        %381 = vmatprep.subr.mxu0 0.0
        %382 = vmatpush1.msra.mxu0 %v373
        %383 = vmatprep.subr.mxu0 0.0
        %384 = vmatpush1.msra.mxu0 %v374
        %385 = vmatprep.subr.mxu0 0.0
        %386 = vmatpush1.msra.mxu0 0.0
        %387 = vmatprep.subr.mxu0 0.0
        %388 = vmatpush1.msra.mxu0 0.0
        %389 = vmatprep.subr.mxu0 0.0
        %390 = vmatpush1.msra.mxu0 0.0
        %391 = vmatprep.subr.mxu0 0.0
        %392 = vmatpush1.msra.mxu0 0.0
        %393 = vmatprep.subr.mxu0 0.0
        %394 = vmatpush1.msra.mxu0 0.0
        %395 = vmatprep.subr.mxu0 0.0
        %396 = vmatpush1.msra.mxu0 0.0
        %397 = vmatprep.subr.mxu0 0.0
        %398 = vmatpush1.msra.mxu0 0.0
        %399 = vmatprep.subr.mxu0 0.0
        %400 = vmatpush1.msra.mxu0 0.0
        %401 = vmatprep.subr.mxu0 0.0
        %402 = vmatpush1.msra.mxu0 0.0
        %403 = vmatprep.subr.mxu0 0.0
        %404 = vmatpush1.msra.mxu0 0.0
        %405 = vmatprep.subr.mxu0 0.0
        %406 = vmatpush1.msra.mxu0 0.0
        %407 = vmatprep.subr.mxu0 0.0
        %408 = vmatpush1.msra.mxu0 0.0
        %409 = vmatprep.subr.mxu0 0.0
        %410 = vmatpush1.msra.mxu0 0.0
        %411 = vmatprep.subr.mxu0 0.0
        %412 = vmatpush1.msra.mxu0 0.0
        %413 = vmatprep.subr.mxu0 0.0
        %414 = vmatpush1.msra.mxu0 0.0
        %415 = vmatprep.subr.mxu0 0.0
        %416 = vmatpush1.msra.mxu0 0.0
        %417 = vmatprep.subr.mxu0 0.0
        %418 = vmatpush1.msra.mxu0 0.0
        %419 = vmatprep.subr.mxu0 0.0
        %420 = vmatpush1.msra.mxu0 0.0
        %421 = vmatprep.subr.mxu0 0.0
        %422 = vmatpush1.msra.mxu0 0.0
        %423 = vmatprep.subr.mxu0 0.0
        %424 = vmatpush1.msra.mxu0 0.0
        %425 = vmatprep.subr.mxu0 0.0
        %426 = vmatpush1.msra.mxu0 0.0
        %427 = vmatprep.subr.mxu0 0.0
        %428 = vmatpush1.msra.mxu0 0.0
        %429 = vmatprep.subr.mxu0 0.0
        %430 = vmatpush1.msra.mxu0 0.0
        %431 = vmatprep.subr.mxu0 0.0
        %432 = vmatpush1.msra.mxu0 0.0
        %433 = vmatprep.subr.mxu0 0.0
        %434 = vmatpush1.msra.mxu0 0.0
        %435 = vmatprep.subr.mxu0 0.0
        %436 = vmatpush1.msra.mxu0 0.0
        %437 = vmatprep.subr.mxu0 0.0
        %438 = vmatpush1.msra.mxu0 0.0
        %439 = vmatprep.subr.mxu0 0.0
        %440 = vmatpush1.msra.mxu0 0.0
        %441 = vmatprep.subr.mxu0 0.0
        %442 = vmatpush1.msra.mxu0 0.0
        %443 = vmatprep.mubr.f32.mxu0 0.0
        %444 = vmatmul.mubr.f32.gmra.mrb[0].mxu0 %v377
        %v445 = vpop.f32.mrb[0].mxu0
        %v446 = vadd.f32 0.0, %v445
        %v447 = vpop.f32.mrb[0].mxu0
        %448 = vdwg.mxu0
        %v457 = vunpack.c.l.b16 %v361
        %v458 = vunpack.c.l.b16 %v362
        %v459 = vunpack.c.l.b16 %v363
        %v460 = vunpack.c.l.b16 %v364
        %v461 = vunpack.c.l.b16 %v365
        %v462 = vunpack.c.l.b16 %v366
        %v463 = vunpack.c.l.b16 %v367
        %v464 = vunpack.c.l.b16 %v368
        %vm465 = vcmask 1041409
        %v466 = vsel %vm465, %v458, %v457
        %vm467 = vcmask 1042434
        %v468 = vsel %vm467, %v459, %v466
        %vm469 = vcmask 1043459
        %v470 = vsel %vm469, %v460, %v468
        %vm471 = vcmask 1044484
        %v472 = vsel %vm471, %v461, %v470
        %vm473 = vcmask 1045509
        %v474 = vsel %vm473, %v462, %v472
        %vm475 = vcmask 1046534
        %v476 = vsel %vm475, %v463, %v474
        %vm477 = vcmask 1047559
        %v478 = vsel %vm477, %v464, %v476
        %v479 = vpack.c.b16 %v478, %v478
        %v482 = vunpack.c.l.b16 %v369
        %v483 = vunpack.c.l.b16 %v370
        %v484 = vpack.c.b16 %v483, %v482
        %v487 = vsel %vm278, %v479, 0
        %489 = vmatprep.subr.bf16.mxu0 0
        %490 = vmatpush1.bf16.msra.mxu0 %v484
        %491 = vmatprep.subr.bf16.mxu0 0
        %492 = vmatpush1.bf16.msra.mxu0 0
        %493 = vmatprep.subr.bf16.mxu0 0
        %494 = vmatpush1.bf16.msra.mxu0 0
        %495 = vmatprep.subr.bf16.mxu0 0
        %496 = vmatpush1.bf16.msra.mxu0 0
        %497 = vmatprep.subr.bf16.mxu0 0
        %498 = vmatpush1.bf16.msra.mxu0 0
        %499 = vmatprep.subr.bf16.mxu0 0
        %500 = vmatpush1.bf16.msra.mxu0 0
        %501 = vmatprep.subr.bf16.mxu0 0
        %502 = vmatpush1.bf16.msra.mxu0 0
        %503 = vmatprep.subr.bf16.mxu0 0
        %504 = vmatpush1.bf16.msra.mxu0 0
        %505 = vmatprep.subr.bf16.mxu0 0
        %506 = vmatpush1.bf16.msra.mxu0 0
        %507 = vmatprep.subr.bf16.mxu0 0
        %508 = vmatpush1.bf16.msra.mxu0 0
        %509 = vmatprep.subr.bf16.mxu0 0
        %510 = vmatpush1.bf16.msra.mxu0 0
        %511 = vmatprep.subr.bf16.mxu0 0
        %512 = vmatpush1.bf16.msra.mxu0 0
        %513 = vmatprep.subr.bf16.mxu0 0
        %514 = vmatpush1.bf16.msra.mxu0 0
        %515 = vmatprep.subr.bf16.mxu0 0
        %516 = vmatpush1.bf16.msra.mxu0 0
        %517 = vmatprep.subr.bf16.mxu0 0
        %518 = vmatpush1.bf16.msra.mxu0 0
        %519 = vmatprep.subr.bf16.mxu0 0
        %520 = vmatpush1.bf16.msra.mxu0 0
        %521 = vmatprep.mubr.bf16.mxu0 0
        %522 = vmatmul.mubr.bf16.gmra.mrb[0].mxu0 %v487
        %v523 = vpop.f32.mrb[0].mxu0
        %v524 = vadd.f32 %v446, %v523
        %v525 = vpop.f32.mrb[0].mxu0
        %v526 = vpop.f32.mrb[0].mxu0
        %v527 = vpop.f32.mrb[0].mxu0
        %528 = vdwg.mxu0
        %v529 = vld [vmem:[%s4] sm:$0x1]
        %v531 = vlaneseq
        %v532 = vshrl.u32 %v531, 7
        %v533 = vsub.s32 0, %v532
        %v534 = vrot.slane %v529, %v533
        %v536 = vadd.f32 %v524, %v534
        %537 = vst [vmem:[%s233] sm:$0xff] %v536
        %s538 = sand.u32 %s142, 1
        %s539 = scalar_lea.sflag [#allocation3], %s538
        %s540 = sand.u32 %s142, 1
        %s541 = smul.addr %s540, 8
        %s542 = scalar_lea.vmem [#allocation2], %s541
        // Predicated region
        $region41: #{tpu_custom_call.1} parent=39 // pred_check
          %p543 = pneg %p152
        $region42: #{tpu_custom_call.1} parent=39 // pred_check_branch
          %545 = sbr.rel (%p543) target = $region44
        $region43: #{tpu_custom_call.1} parent=39 // pred_region
          %s547 = ssub.s32 128, 128
          %548 = vsyncadd %s539, %s547
          %s549 = smul.addr %s19, 128
          %s550 = scalar_lea.hbm %s5, %s549
          %s552 = sshll.u32 %s542, 4
          %s553 = int_to_ptr.vmem [resolvable:$true] %s552
          %555 = dma.vmem_to_hbm [thread:$0]  %s553, 128, %s550, %s539
        $region44: #{tpu_custom_call.1} parent=39 // pred_fallthru
          _
      $region40: #{tpu_custom_call.1} parent=5 // pred_fallthru
        _
      %p556 = scmp.le.s32.totalorder 2, %s14
      // Predicated region
      $region45: #{tpu_custom_call.1} parent=5 // pred_check
        %p557 = pneg %p556
      $region46: #{tpu_custom_call.1} parent=5 // pred_check_branch
        %559 = sbr.rel (%p557) target = $region48
      $region47: #{tpu_custom_call.1} parent=5 // pred_region
        %s560 = ssub.s32 %s14, 2
        // Predicated region
        $region49: #{tpu_custom_call.1} parent=47 // pred_check
          %p561 = pneg %p158
        $region50: #{tpu_custom_call.1} parent=47 // pred_check_branch
          %563 = sbr.rel (%p561) target = $region52
        $region51: #{tpu_custom_call.1} parent=47 // pred_region
          %s564 = sand.u32 %s143, 1
          %s565 = scalar_lea.sflag [#allocation3], %s564
          %s566 = sand.u32 %s143, 1
          %s567 = smul.addr %s566, 8
          %s568 = scalar_lea.vmem [#allocation2], %s567
          %569 = dma.done %s565, 128
        $region52: #{tpu_custom_call.1} parent=47 // pred_fallthru
          _
      $region48: #{tpu_custom_call.1} parent=5 // pred_fallthru
        _
    $region6: #{tpu_custom_call.1} parent=1 // loop_footer
      %s18 = sadd.s32 1, %s14
    $region7: #{tpu_custom_call.1} parent=1 // loop_footer_branch
      %13 = sbr.rel target = $region3
    $region8: #{tpu_custom_call.1} parent=1 // loop_exit
      _
    %570 = vsyncpa [#allocation3], 1
    %s571 = scalar_lea.sflag [#allocation3], 1
    %572 = vsyncpa %s571, 1

</llo_original>
